<compile_context>
chip_gen: v6e
topology: v6e:2x2x1
jax: 0.10.0
libtpu: 0.0.40
codegen_flags: <defaults>
</compile_context>

<pallas_src>
import jax
import jax.numpy as jnp
from jax.experimental import pallas as pl
from jax.experimental.pallas import tpu as pltpu


def _round_up(a, b):
    return (a + b - 1) // b * b


def _drop_path_kernel(x_ref, m_ref, o_ref):
    # x_ref: (tb, tf) tile of the flattened input
    # m_ref: (tb, 1)  per-sample keep/scale factor (already includes 1/keep_prob)
    o_ref[...] = x_ref[...] * m_ref[...]


def _choose_tiles(B, F, itemsize):
    LANE = 128
    TB_CAP = 256                      # multiple of 32: packed for f32/bf16/int8
    TARGET_TILE_BYTES = 2 << 20       # ~2 MiB per tile
    MAX_TILE_BYTES = 4 << 20

    tb = B if B <= TB_CAP else TB_CAP
    row_bytes = max(1, tb * itemsize)

    tf = max(LANE, (TARGET_TILE_BYTES // row_bytes) // LANE * LANE)
    tf_cap = max(LANE, (MAX_TILE_BYTES // row_bytes) // LANE * LANE)

    if tf >= F:
        if B <= TB_CAP and F > 2 * LANE:
            # Single batch block: split F so v7x megacore gets >= 2 blocks.
            tf = min(tf_cap, _round_up((F + 1) // 2, LANE))
        else:
            tf = F   # block dim == full array dim: exempt from 128-divisibility
    else:
        tf = min(tf, tf_cap)
    return tb, tf


def drop_path_apply(x2d, mask2d):
    """x2d: (B, F), mask2d: (B, 1). Returns x2d * mask2d in one Pallas pass."""
    B, F = x2d.shape
    itemsize = x2d.dtype.itemsize
    tb, tf = _choose_tiles(B, F, itemsize)

    grid = (pl.cdiv(B, tb), pl.cdiv(F, tf))

    # 2x double-buffered in + out tiles plus mask/headroom; never the full VMEM.
    tile_bytes = tb * tf * itemsize
    footprint = 4 * tile_bytes + (1 << 20)
    try:
        hw_vmem = int(pltpu.get_tpu_info().vmem_capacity_bytes)
    except Exception:
        hw_vmem = 64 << 20
    vmem_limit = int(min(max(footprint, 16 << 20), 48 << 20, hw_vmem * 3 // 4))

    return pl.pallas_call(
        _drop_path_kernel,
        out_shape=jax.ShapeDtypeStruct((B, F), x2d.dtype),
        grid_spec=pltpu.PrefetchScalarGridSpec(
            num_scalar_prefetch=0,
            grid=grid,
            in_specs=[
                pl.BlockSpec((tb, tf), lambda i, j: (i, j)),
                pl.BlockSpec((tb, 1), lambda i, j: (i, 0)),
            ],
            out_specs=pl.BlockSpec((tb, tf), lambda i, j: (i, j)),
        ),
        compiler_params=pltpu.CompilerParams(
            dimension_semantics=("parallel", "parallel"),
            vmem_limit_bytes=vmem_limit),
    )(x2d, mask2d)


def _make_mask(key, batch, dtype, drop_prob, scale_by_keep):
    """Per-sample keep/scale factor, matching torch's bernoulli_(keep).div_(keep)."""
    keep_prob = 1.0 - drop_prob
    keep = jax.random.bernoulli(key, p=keep_prob, shape=(batch,))
    mask = keep.astype(dtype)
    if keep_prob > 0.0 and scale_by_keep:
        mask = mask / jnp.asarray(keep_prob, dtype)
    return mask


class DropPathPallas:
    """Drop paths (Stochastic Depth) per sample -- Pallas TPU forward."""

    def __init__(self, drop_prob=None, scale_by_keep=True):
        self.drop_prob = drop_prob
        self.scale_by_keep = scale_by_keep
        self.training = True

    def __call__(self, x, key=None):
        dp = 0.0 if self.drop_prob is None else float(self.drop_prob)
        if dp == 0.0 or not self.training:
            return x  # identity path, exactly like the PyTorch module
        B = x.shape[0]
        # TODO(synk): the B Bernoulli scalars are drawn with jax.random outside
        # the kernel; they could be moved in-kernel with pltpu.prng_seed /
        # pltpu.stateful_bernoulli if host-side RNG must be avoided.
        mask = _make_mask(key, B, x.dtype, dp, self.scale_by_keep)
        out2d = drop_path_apply(x.reshape(B, -1), mask.reshape(B, 1))
        return out2d.reshape(x.shape)


def _reference(x, mask):
    shape = (x.shape[0],) + (1,) * (x.ndim - 1)
    return x * mask.reshape(shape)


if __name__ == "__main__":
    key = jax.random.PRNGKey(0)
    kx, kmask, kx2, kmask2, kx3, kmask3 = jax.random.split(key, 6)

    drop_prob = 0.25
    mod = DropPathPallas(drop_prob=drop_prob, scale_by_keep=True)

    # 1) Small typical shape (B, seq, hidden): single-block path.
    B, S, C = 2, 8, 32
    x = jax.random.normal(kx, (B, S, C), dtype=jnp.float32)
    mod.training = True
    out = jax.block_until_ready(mod(x, key=kmask))
    ref = _reference(x, _make_mask(kmask, B, x.dtype, drop_prob, True))
    assert out.shape == x.shape, (out.shape, x.shape)
    assert jnp.allclose(out, ref, atol=1e-6, rtol=1e-6), (
        float(jnp.max(jnp.abs(out - ref))))

    # Eval path is exact identity.
    mod.training = False
    assert jnp.array_equal(jax.block_until_ready(mod(x, key=kmask)), x)
    mod.training = True

    # 2) Ragged lane path: F=500 (not a multiple of 128) -> tf=256, last
    #    feature block overhangs (no pad/slice round trips).
    B2, S2, C2 = 4, 5, 100
    x2 = jax.random.normal(kx2, (B2, S2, C2), dtype=jnp.float32)
    out2 = jax.block_until_ready(mod(x2, key=kmask2))
    ref2 = _reference(x2, _make_mask(kmask2, B2, x2.dtype, drop_prob, True))
    assert out2.shape == x2.shape
    assert jnp.allclose(out2, ref2, atol=1e-6, rtol=1e-6), (
        float(jnp.max(jnp.abs(out2 - ref2))))

    # 3) bf16 activations (typical training dtype); same per-sample semantics.
    B3, S3, C3 = 8, 16, 48
    x3 = jax.random.normal(kx3, (B3, S3, C3), dtype=jnp.float32).astype(jnp.bfloat16)
    out3 = jax.block_until_ready(mod(x3, key=kmask3))
    ref3 = _reference(x3, _make_mask(kmask3, B3, x3.dtype, drop_prob, True))
    assert out3.shape == x3.shape
    assert jnp.allclose(out3.astype(jnp.float32), ref3.astype(jnp.float32),
                        atol=1e-2, rtol=1e-2)

    print("KERNEL_OK")
</pallas_src>

<mosaic_0001>
module attributes {stable_mosaic.version = 11 : i64} {
  func.func @_drop_path_kernel(%arg0: i32, %arg1: i32, %arg2: memref<2x256xf32, #tpu.memory_space<vmem>>, %arg3: memref<2x1xf32, #tpu.memory_space<vmem>>, %arg4: memref<2x256xf32, #tpu.memory_space<vmem>>) attributes {dimension_semantics = [#tpu.dimension_semantics<parallel>, #tpu.dimension_semantics<parallel>], iteration_bounds = array<i64: 1, 1>, scalar_prefetch = 0 : i64, scratch_operands = 0 : i64, tpu.core_type = #tpu.core_type<tc>, window_params = [{transform_indices = @transform_0, window_bounds = array<i64: 2, 256>}, {transform_indices = @transform_1, window_bounds = array<i64: 2, 1>}, {transform_indices = @transform_2, window_bounds = array<i64: 2, 256>}]} {
    %c0 = arith.constant 0 : index
    %c0_0 = arith.constant 0 : index
    %0 = vector.load %arg2[%c0, %c0_0] : memref<2x256xf32, #tpu.memory_space<vmem>>, vector<2x256xf32>
    %c0_1 = arith.constant 0 : index
    %c0_2 = arith.constant 0 : index
    %1 = vector.load %arg3[%c0_1, %c0_2] : memref<2x1xf32, #tpu.memory_space<vmem>>, vector<2x1xf32>
    %2 = vector.broadcast %1 : vector<2x1xf32> to vector<2x256xf32>
    %3 = arith.mulf %0, %2 : vector<2x256xf32>
    %c0_3 = arith.constant 0 : index
    %c0_4 = arith.constant 0 : index
    %4 = vector.load %arg4[%c0_3, %c0_4] : memref<2x256xf32, #tpu.memory_space<vmem>>, vector<2x256xf32>
    tpu.vector_store %arg4[%c0_3, %c0_4], %3 {strides = array<i32>} : memref<2x256xf32, #tpu.memory_space<vmem>>, vector<2x256xf32>,
    return
  }
  func.func @transform_0(%arg0: i32, %arg1: i32) -> (i32, i32) {
    %c0_i32 = arith.constant 0 : i32
    return %arg0, %arg1 : i32, i32
  }
  func.func @transform_1(%arg0: i32, %arg1: i32) -> (i32, i32) {
    %c0_i32 = arith.constant 0 : i32
    %c0_i32_0 = arith.constant 0 : i32
    return %arg0, %c0_i32 : i32, i32
  }
  func.func @transform_2(%arg0: i32, %arg1: i32) -> (i32, i32) {
    %c0_i32 = arith.constant 0 : i32
    return %arg0, %arg1 : i32, i32
  }
}

</mosaic_0001>

<llo_original>
// kernel: tpu_custom_call.1
$region0: #{tpu_custom_call.1}
  #allocation0 [shape = 'u32[]', space=smem, size = 0x4, offset = 0x4, fixed_abs, tag = 'smem constant byte address 0x4 - core index']
  #allocation1 [shape = 'u32[144,128]{1,0:T(1,128)}', space=vmem, size = 0x12000, scoped, tag = 'internal scratch']
  %s0 = inlined_call_operand.hbm [shape: f32[2,256], index: 0, kind: input, shape index: {}]
  %s1 = inlined_call_operand.vmem [shape: f32[2,1], index: 1, kind: input, shape index: {}]
  %s2 = inlined_call_operand.hbm [shape: f32[2,256], index: 2, kind: output, shape index: {}]
  %s3 = sld [smem:[#allocation0]]
  $region22: #{tpu_custom_call.1} parent=0
    _
  %s5 = ssub.s32 1, %s3
  %s6 = scalar_select 0, %s5, %s3
  $region1: #{tpu_custom_call.1} parent=0
    #allocation2 [shape = 'u8[2048]{0}', space=vmem, size = 0x800, scoped, tag = 'input window, operand 0, single buffered']
    #allocation3 [shape = 's32[1]{0}', space=sflag, size = 0x4, scoped, tag = 'scoped memory for tpu_custom_call.1']
    #allocation4 [shape = 's32[1]{0}', space=sflag, size = 0x4, scoped, tag = 'scoped memory for tpu_custom_call.1']
    #allocation5 [shape = 'u8[2048]{0}', space=vmem, size = 0x800, scoped, tag = 'output window, operand 0, single buffered']
    %7 = vsyncpa [#allocation3], 0
    %8 = vsyncpa [#allocation4], 0
    // Predicated region
    $region2: #{tpu_custom_call.1} parent=1 // pred_check
      _
    $region3: #{tpu_custom_call.1} parent=1 // pred_check_branch
      %10 = sbr.rel (0) target = $region5
    $region4: #{tpu_custom_call.1} parent=1 // pred_region
      %s12 = ssub.s32 64, 64
      %13 = vsyncadd [#allocation3], %s12
      %s15 = sshll.u32 [#allocation2], 4
      %s16 = int_to_ptr.vmem [resolvable:$true] %s15
      %18 = dma.hbm_to_vmem [thread:$0]  %s0, 64, %s16, [#allocation3]
    $region5: #{tpu_custom_call.1} parent=1 // pred_fallthru
      _
    // Predicated region
    $region6: #{tpu_custom_call.1} parent=1 // pred_check
      _
    $region7: #{tpu_custom_call.1} parent=1 // pred_check_branch
      %20 = sbr.rel (0) target = $region9
    $region8: #{tpu_custom_call.1} parent=1 // pred_region
      _
    $region9: #{tpu_custom_call.1} parent=1 // pred_fallthru
      _
    // Predicated region
    $region10: #{tpu_custom_call.1} parent=1 // pred_check
      _
    $region11: #{tpu_custom_call.1} parent=1 // pred_check_branch
      %22 = sbr.rel (0) target = $region13
    $region12: #{tpu_custom_call.1} parent=1 // pred_region
      %23 = dma.done [#allocation3], 64
    $region13: #{tpu_custom_call.1} parent=1 // pred_fallthru
      _
    %v24 = vld [vmem:[#allocation2] sm:$0xf]
    %v25 = vld [vmem:[%s1] sm:$0x3]
    %27 = vset.pattern.permute.xlu0 0
    %28 = vperm.xlu0 %27, %v25
    %v29 = vpop.permute.xlu0 %28
    %v31 = vunpack.c.l.s4 269488144
    %v32 = vunpack.c.0.s8 %v31
    %v33 = vlaneseq
    %v34 = vshrl.u32 %v33, 7
    %v35 = vsub.s32 %v32, %v34
    %v36 = vrot.slane %v29, %v35
    %v38 = vmul.f32 %v24, %v36
    %39 = vst [vmem:[#allocation5] sm:$0xf] %v38
    // Predicated region
    $region14: #{tpu_custom_call.1} parent=1 // pred_check
      _
    $region15: #{tpu_custom_call.1} parent=1 // pred_check_branch
      %41 = sbr.rel (0) target = $region17
    $region16: #{tpu_custom_call.1} parent=1 // pred_region
      %s43 = ssub.s32 64, 64
      %44 = vsyncadd [#allocation4], %s43
      %s46 = sshll.u32 [#allocation5], 4
      %s47 = int_to_ptr.vmem [resolvable:$true] %s46
      %49 = dma.vmem_to_hbm [thread:$0]  %s47, 64, %s2, [#allocation4]
    $region17: #{tpu_custom_call.1} parent=1 // pred_fallthru
      _
    // Predicated region
    $region18: #{tpu_custom_call.1} parent=1 // pred_check
      _
    $region19: #{tpu_custom_call.1} parent=1 // pred_check_branch
      %51 = sbr.rel (0) target = $region21
    $region20: #{tpu_custom_call.1} parent=1 // pred_region
      %52 = dma.done [#allocation4], 64
    $region21: #{tpu_custom_call.1} parent=1 // pred_fallthru
      _
    %53 = vsyncpa [#allocation3], 1
    %54 = vsyncpa [#allocation4], 1

</llo_original>
